<compile_context>
chip_gen: v5e
topology: v5e:2x2
jax: 0.10.0
libtpu: 0.0.40
codegen_flags: <defaults>
</compile_context>

<pallas_src>
import jax
import jax.numpy as jnp
from jax.experimental import pallas as pl
from jax.experimental.pallas import tpu as pltpu


IGNORE_INDEX = 255
DICE_SMOOTH = 0.0
DICE_EPS = 1e-10
# TODO(synk): LabelSmoothCELoss source is not in the spec; standard smoothed-CE form
# (1-eps)*NLL + eps*(-mean_c log-softmax), eps=0.1, mean over non-ignored pixels, is assumed.
LABEL_SMOOTH = 0.1
CE_WEIGHT = 0.5
DICE_WEIGHT = 0.5

_LANES = 128
_SUB = 256                                 # rows per in-kernel compute chunk (bounds temporaries)
_INPUT_VMEM_BUDGET = 18 * 1024 * 1024      # double-buffered input bytes per grid step
_VMEM_LIMIT = 40 * 1024 * 1024             # explicit scoped-VMEM cap (safe on v5e/v6e/v7x)


def _make_kernel(c, tile_r, sub, r_steps, n_rows, has_tail):
    """Build the fused smooth-CE + Dice partial-reduction kernel.

    Per grid step:
      preds_ref : (c, tile_r, 128) logits (f32 or bf16)
      labels_ref: (tile_r, 128)    integer labels (255 == ignore)
      out_ref   : (3, 128) f32     per-(batch, split) lane partials [sum p_y, n_valid, sum ce]
      acc_ref   : VMEM (3, 8, 128) f32 running vreg-shaped accumulator
    """
    n_full = tile_r // sub
    rem = tile_r % sub

    def _fold8(x):
        # (size, 128) -> (8, 128) partial sums; pure VALU adds (size % 8 == 0 always).
        size = x.shape[0]
        return jnp.sum(x.reshape(size // 8, 8, _LANES), axis=0)

    def kernel(preds_ref, labels_ref, out_ref, acc_ref):
        ri = pl.program_id(2)

        @pl.when(ri == 0)
        def _():
            acc_ref[...] = jnp.zeros_like(acc_ref)

        if has_tail:
            # UNclamped logical row offset of this block (for tail / duplicate-block masking)
            row0 = (pl.program_id(1) * r_steps + ri) * tile_r
        else:
            row0 = 0

        def process(start, size):
            lab = labels_ref[pl.ds(start, size), :].astype(jnp.int32)

            # channel max: per-channel VMEM reads, no full f32 logits copy materialized
            x0 = preds_ref[0, pl.ds(start, size), :].astype(jnp.float32)
            m = x0
            for k in range(1, c):
                m = jnp.maximum(m, preds_ref[k, pl.ds(start, size), :].astype(jnp.float32))

            s = jnp.exp(x0 - m)
            l_true = jnp.where(lab == 0, x0, 0.0)
            l_sum = x0
            for k in range(1, c):
                xk = preds_ref[k, pl.ds(start, size), :].astype(jnp.float32)
                s = s + jnp.exp(xk - m)
                l_true = l_true + jnp.where(lab == k, xk, 0.0)
                l_sum = l_sum + xk
            lse = m + jnp.log(s)                               # log-sum-exp

            valid = lab != IGNORE_INDEX
            if has_tail:                                        # mask cdiv / split-duplicate rows
                rows = row0 + start + jax.lax.broadcasted_iota(jnp.int32, (size, _LANES), 0)
                valid = jnp.logical_and(valid, rows < n_rows)

            # softmax prob of true class: exp(logit_y - lse) — exact, no approx reciprocal,
            # and garbage (possibly NaN/inf) tail logits are killed by the boolean select.
            inter = jnp.where(valid, jnp.exp(l_true - lse), 0.0)
            # smoothed CE with constants folded: (1-eps)*(lse-l_y) + eps*(lse - mean_c l_c)
            ce = jnp.where(
                valid,
                lse - (1.0 - LABEL_SMOOTH) * l_true - (LABEL_SMOOTH / c) * l_sum,
                0.0)
            nv = jnp.where(valid, 1.0, 0.0)

            acc_ref[0] += _fold8(inter)
            acc_ref[1] += _fold8(nv)
            acc_ref[2] += _fold8(ce)

        def body(i, carry):
            process(pl.multiple_of(i * sub, sub), sub)
            return carry

        jax.lax.fori_loop(0, n_full, body, 0)
        if rem:
            process(n_full * sub, rem)

        @pl.when(ri == r_steps - 1)
        def _():
            # single cross-sublane reduce per (batch, split); lane reduce in the wrapper
            out_ref[...] = jnp.sum(acc_ref[...], axis=1)

    return kernel


def _pick_tile_rows(n_rows, c, pred_itemsize, lab_itemsize):
    # Only the double-buffered inputs are budgeted here; in-kernel temporaries are bounded
    # separately by the _SUB-row chunking (≈1 MiB), and the accumulator is 12 KiB.
    per_row = 2 * c * _LANES * pred_itemsize + 2 * _LANES * lab_itemsize
    cap = int(_INPUT_VMEM_BUDGET // per_row)
    if cap >= _SUB:
        cap = (cap // _SUB) * _SUB
    elif cap >= 32:
        cap = (cap // 32) * 32
    else:
        cap = 32
    cap = min(cap, 4096)
    return n_rows if n_rows <= cap else cap


@jax.jit
def smooth_ce_dice_loss(output, target):
    """output: (B, C, H, W) float logits; target: (B, H, W) int labels (255 = ignore)."""
    b, c, h, w = output.shape
    p = h * w

    preds = output.reshape(b, c, p)                       # free reshape, no transpose
    labels = target.reshape(b, p)
    if labels.dtype not in (jnp.int32, jnp.uint8):
        labels = labels.astype(jnp.int32)
    # TODO(synk): callers with uint8 label maps should pass uint8 to cut label HBM traffic
    # 4x; we deliberately do not downcast int32 here (that would cost an extra HBM pass).

    # Pad pixels to a multiple of 32*128 so every block is (8,128)/(32,128)-aligned.
    # No-op (no copy) for typical segmentation shapes (H*W % 4096 == 0).
    pad_px = (-p) % (32 * _LANES)
    if pad_px:
        preds = jnp.pad(preds, ((0, 0), (0, 0), (0, pad_px)))
        labels = jnp.pad(labels, ((0, 0), (0, pad_px)), constant_values=IGNORE_INDEX)
    n_rows = (p + pad_px) // _LANES
    preds = preds.reshape(b, c, n_rows, _LANES)
    labels = labels.reshape(b, n_rows, _LANES)

    tile_r = _pick_tile_rows(n_rows, c, jnp.dtype(output.dtype).itemsize,
                             jnp.dtype(labels.dtype).itemsize)
    sub = min(_SUB, tile_r)
    n_blocks = -(-n_rows // tile_r)
    # Give the 'parallel' axes >= 2 work units when B == 1 so both v7x TensorCores help.
    n_split = 2 if (b == 1 and n_blocks >= 2) else 1
    r_steps = -(-n_blocks // n_split)
    has_tail = (n_split * r_steps * tile_r) > n_rows

    kernel = _make_kernel(c, tile_r, sub, r_steps, n_rows, has_tail)

    partials = pl.pallas_call(
        kernel,
        out_shape=jax.ShapeDtypeStruct((b, n_split, 3, _LANES), jnp.float32),
        grid_spec=pltpu.PrefetchScalarGridSpec(
            num_scalar_prefetch=0,
            grid=(b, n_split, r_steps),
            in_specs=[
                pl.BlockSpec(
                    (None, c, tile_r, _LANES),
                    lambda bi, si, ri: (bi, 0, jnp.minimum(si * r_steps + ri, n_blocks - 1), 0)),
                pl.BlockSpec(
                    (None, tile_r, _LANES),
                    lambda bi, si, ri: (bi, jnp.minimum(si * r_steps + ri, n_blocks - 1), 0)),
            ],
            out_specs=pl.BlockSpec((None, None, 3, _LANES),
                                   lambda bi, si, ri: (bi, si, 0, 0)),
            scratch_shapes=[pltpu.VMEM((3, 8, _LANES), jnp.float32)],
        ),
        compiler_params=pltpu.CompilerParams(
            dimension_semantics=("parallel", "parallel", "arbitrary"),
            vmem_limit_bytes=_VMEM_LIMIT,
        ),
    )(preds, labels)

    sums = jnp.sum(partials, axis=(0, 1, 3))              # (3,) tiny finalize in XLA
    intersection, n_valid, ce_sum = sums[0], sums[1], sums[2]

    # DiceLoss: sum of softmax probs over valid pixels == n_valid, so denominator = 2*n_valid.
    dice = 1.0 - (2.0 * intersection + DICE_SMOOTH) / (2.0 * n_valid + DICE_SMOOTH + DICE_EPS)
    ce = ce_sum / n_valid          # NaN if every pixel is ignored (matches the reference)
    return CE_WEIGHT * ce + DICE_WEIGHT * dice


def _reference(output, target):
    # Pure-JAX mirror of SmoothCE_DiceLoss.forward (correctness check only).
    c = output.shape[1]
    logits = output.astype(jnp.float32).transpose(0, 2, 3, 1).reshape(-1, c)
    labels = target.reshape(-1)
    vf = (labels != IGNORE_INDEX).astype(jnp.float32)

    logp = jax.nn.log_softmax(logits, axis=-1)
    probs = jnp.exp(logp)
    onehot = jax.nn.one_hot(labels, c, dtype=jnp.float32) * vf[:, None]

    intersection = jnp.sum(probs * onehot)
    psum = jnp.sum(probs * vf[:, None])
    lsum = jnp.sum(onehot)
    dice = 1.0 - (2.0 * intersection + DICE_SMOOTH) / (psum + lsum + DICE_SMOOTH + DICE_EPS)

    nll = -jnp.sum(logp * onehot, axis=-1)
    smooth = -jnp.mean(logp, axis=-1)
    ce_pix = (1.0 - LABEL_SMOOTH) * nll + LABEL_SMOOTH * smooth
    ce = jnp.sum(ce_pix * vf) / jnp.sum(vf)

    return CE_WEIGHT * ce + DICE_WEIGHT * dice


if __name__ == "__main__":
    key = jax.random.PRNGKey(0)
    k1, k2, k3 = jax.random.split(key, 3)

    B, C, H, W = 2, 4, 16, 16
    x = jax.random.normal(k1, (B, C, H, W), dtype=jnp.float32)
    labels = jax.random.randint(k2, (B, H, W), 0, C, dtype=jnp.int32)
    # mark ~10% of pixels as ignore_index
    ignore_mask = jax.random.uniform(k3, (B, H, W)) < 0.1
    labels = jnp.where(ignore_mask, jnp.int32(IGNORE_INDEX), labels)

    loss = smooth_ce_dice_loss(x, labels)
    jax.block_until_ready(loss)

    ref = _reference(x, labels)
    assert jnp.allclose(loss, ref, rtol=1e-3, atol=1e-3), (float(loss), float(ref))

    print("KERNEL_OK")
</pallas_src>

<mosaic_0001>
module attributes {stable_mosaic.version = 11 : i64} {
  func.func @kernel(%arg0: i32, %arg1: i32, %arg2: i32, %arg3: memref<1x4x32x128xf32, #tpu.memory_space<vmem>>, %arg4: memref<1x32x128xi32, #tpu.memory_space<vmem>>, %arg5: memref<1x1x3x128xf32, #tpu.memory_space<vmem>>, %arg6: memref<3x8x128xf32, #tpu.memory_space<vmem>>) attributes {dimension_semantics = [#tpu.dimension_semantics<parallel>, #tpu.dimension_semantics<parallel>, #tpu.dimension_semantics<arbitrary>], iteration_bounds = array<i64: 2, 1, 1>, scalar_prefetch = 0 : i64, scratch_operands = 1 : i64, tpu.core_type = #tpu.core_type<tc>, window_params = [{transform_indices = @transform_0, window_bounds = array<i64: 1, 4, 32, 128>}, {transform_indices = @transform_1, window_bounds = array<i64: 1, 32, 128>}, {transform_indices = @transform_2, window_bounds = array<i64: 1, 1, 3, 128>}]} {
    %c0_i32 = arith.constant 0 : i32
    %0 = arith.cmpi eq, %arg2, %c0_i32 : i32
    %1 = arith.extui %0 : i1 to i32
    %c0_i32_0 = arith.constant 0 : i32
    %2 = arith.cmpi ne, %1, %c0_i32_0 : i32
    scf.if %2 {
      %cst_55 = arith.constant 0.000000e+00 : f32
      %111 = vector.broadcast %cst_55 : f32 to vector<3x8x128xf32>
      %c0_56 = arith.constant 0 : index
      %c0_57 = arith.constant 0 : index
      %c0_58 = arith.constant 0 : index
      %112 = vector.load %arg6[%c0_56, %c0_57, %c0_58] : memref<3x8x128xf32, #tpu.memory_space<vmem>>, vector<3x8x128xf32>
      tpu.vector_store %arg6[%c0_56, %c0_57, %c0_58], %111 {strides = array<i32>} : memref<3x8x128xf32, #tpu.memory_space<vmem>>, vector<3x8x128xf32>,
    } else {
    }
    %c0_i32_1 = arith.constant 0 : i32
    %c32_i32 = arith.constant 32 : i32
    %3 = arith.muli %c0_i32_1, %c32_i32 : i32
    %4 = tpu.assume_multiple %3, 32 : i32
    %c0 = arith.constant 0 : index
    %5 = arith.index_cast %4 : i32 to index
    %c0_2 = arith.constant 0 : index
    %6 = vector.load %arg4[%c0, %5, %c0_2] : memref<1x32x128xi32, #tpu.memory_space<vmem>>, vector<1x32x128xi32>
    %7 = vector.shape_cast %6 : vector<1x32x128xi32> to vector<32x128xi32>
    %c0_3 = arith.constant 0 : index
    %c0_4 = arith.constant 0 : index
    %8 = arith.index_cast %4 : i32 to index
    %c0_5 = arith.constant 0 : index
    %9 = vector.load %arg3[%c0_3, %c0_4, %8, %c0_5] : memref<1x4x32x128xf32, #tpu.memory_space<vmem>>, vector<1x1x32x128xf32>
    %10 = vector.shape_cast %9 : vector<1x1x32x128xf32> to vector<32x128xf32>
    %c0_6 = arith.constant 0 : index
    %c1 = arith.constant 1 : index
    %11 = arith.index_cast %4 : i32 to index
    %c0_7 = arith.constant 0 : index
    %12 = vector.load %arg3[%c0_6, %c1, %11, %c0_7] : memref<1x4x32x128xf32, #tpu.memory_space<vmem>>, vector<1x1x32x128xf32>
    %13 = vector.shape_cast %12 : vector<1x1x32x128xf32> to vector<32x128xf32>
    %14 = arith.maximumf %10, %13 : vector<32x128xf32>
    %c0_8 = arith.constant 0 : index
    %c2 = arith.constant 2 : index
    %15 = arith.index_cast %4 : i32 to index
    %c0_9 = arith.constant 0 : index
    %16 = vector.load %arg3[%c0_8, %c2, %15, %c0_9] : memref<1x4x32x128xf32, #tpu.memory_space<vmem>>, vector<1x1x32x128xf32>
    %17 = vector.shape_cast %16 : vector<1x1x32x128xf32> to vector<32x128xf32>
    %18 = arith.maximumf %14, %17 : vector<32x128xf32>
    %c0_10 = arith.constant 0 : index
    %c3 = arith.constant 3 : index
    %19 = arith.index_cast %4 : i32 to index
    %c0_11 = arith.constant 0 : index
    %20 = vector.load %arg3[%c0_10, %c3, %19, %c0_11] : memref<1x4x32x128xf32, #tpu.memory_space<vmem>>, vector<1x1x32x128xf32>
    %21 = vector.shape_cast %20 : vector<1x1x32x128xf32> to vector<32x128xf32>
    %22 = arith.maximumf %18, %21 : vector<32x128xf32>
    %23 = arith.subf %10, %22 : vector<32x128xf32>
    %24 = math.exp %23 : vector<32x128xf32>
    %c0_i32_12 = arith.constant 0 : i32
    %25 = vector.broadcast %c0_i32_12 : i32 to vector<32x128xi32>
    %26 = arith.cmpi eq, %7, %25 : vector<32x128xi32>
    %cst = arith.constant 0.000000e+00 : f32
    %27 = vector.broadcast %cst : f32 to vector<32x128xf32>
    %28 = arith.select %26, %10, %27 : vector<32x128xi1>, vector<32x128xf32>
    %c0_13 = arith.constant 0 : index
    %c1_14 = arith.constant 1 : index
    %29 = arith.index_cast %4 : i32 to index
    %c0_15 = arith.constant 0 : index
    %30 = vector.load %arg3[%c0_13, %c1_14, %29, %c0_15] : memref<1x4x32x128xf32, #tpu.memory_space<vmem>>, vector<1x1x32x128xf32>
    %31 = vector.shape_cast %30 : vector<1x1x32x128xf32> to vector<32x128xf32>
    %32 = arith.subf %31, %22 : vector<32x128xf32>
    %33 = math.exp %32 : vector<32x128xf32>
    %34 = arith.addf %24, %33 : vector<32x128xf32>
    %c1_i32 = arith.constant 1 : i32
    %35 = vector.broadcast %c1_i32 : i32 to vector<32x128xi32>
    %36 = arith.cmpi eq, %7, %35 : vector<32x128xi32>
    %cst_16 = arith.constant 0.000000e+00 : f32
    %37 = vector.broadcast %cst_16 : f32 to vector<32x128xf32>
    %38 = arith.select %36, %31, %37 : vector<32x128xi1>, vector<32x128xf32>
    %39 = arith.addf %28, %38 : vector<32x128xf32>
    %40 = arith.addf %10, %31 : vector<32x128xf32>
    %c0_17 = arith.constant 0 : index
    %c2_18 = arith.constant 2 : index
    %41 = arith.index_cast %4 : i32 to index
    %c0_19 = arith.constant 0 : index
    %42 = vector.load %arg3[%c0_17, %c2_18, %41, %c0_19] : memref<1x4x32x128xf32, #tpu.memory_space<vmem>>, vector<1x1x32x128xf32>
    %43 = vector.shape_cast %42 : vector<1x1x32x128xf32> to vector<32x128xf32>
    %44 = arith.subf %43, %22 : vector<32x128xf32>
    %45 = math.exp %44 : vector<32x128xf32>
    %46 = arith.addf %34, %45 : vector<32x128xf32>
    %c2_i32 = arith.constant 2 : i32
    %47 = vector.broadcast %c2_i32 : i32 to vector<32x128xi32>
    %48 = arith.cmpi eq, %7, %47 : vector<32x128xi32>
    %cst_20 = arith.constant 0.000000e+00 : f32
    %49 = vector.broadcast %cst_20 : f32 to vector<32x128xf32>
    %50 = arith.select %48, %43, %49 : vector<32x128xi1>, vector<32x128xf32>
    %51 = arith.addf %39, %50 : vector<32x128xf32>
    %52 = arith.addf %40, %43 : vector<32x128xf32>
    %c0_21 = arith.constant 0 : index
    %c3_22 = arith.constant 3 : index
    %53 = arith.index_cast %4 : i32 to index
    %c0_23 = arith.constant 0 : index
    %54 = vector.load %arg3[%c0_21, %c3_22, %53, %c0_23] : memref<1x4x32x128xf32, #tpu.memory_space<vmem>>, vector<1x1x32x128xf32>
    %55 = vector.shape_cast %54 : vector<1x1x32x128xf32> to vector<32x128xf32>
    %56 = arith.subf %55, %22 : vector<32x128xf32>
    %57 = math.exp %56 : vector<32x128xf32>
    %58 = arith.addf %46, %57 : vector<32x128xf32>
    %c3_i32 = arith.constant 3 : i32
    %59 = vector.broadcast %c3_i32 : i32 to vector<32x128xi32>
    %60 = arith.cmpi eq, %7, %59 : vector<32x128xi32>
    %cst_24 = arith.constant 0.000000e+00 : f32
    %61 = vector.broadcast %cst_24 : f32 to vector<32x128xf32>
    %62 = arith.select %60, %55, %61 : vector<32x128xi1>, vector<32x128xf32>
    %63 = arith.addf %51, %62 : vector<32x128xf32>
    %64 = arith.addf %52, %55 : vector<32x128xf32>
    %65 = math.log %58 : vector<32x128xf32>
    %66 = arith.addf %22, %65 : vector<32x128xf32>
    %c255_i32 = arith.constant 255 : i32
    %67 = vector.broadcast %c255_i32 : i32 to vector<32x128xi32>
    %68 = arith.cmpi ne, %7, %67 : vector<32x128xi32>
    %69 = arith.subf %63, %66 : vector<32x128xf32>
    %70 = math.exp %69 : vector<32x128xf32>
    %cst_25 = arith.constant 0.000000e+00 : f32
    %71 = vector.broadcast %cst_25 : f32 to vector<32x128xf32>
    %72 = arith.select %68, %70, %71 : vector<32x128xi1>, vector<32x128xf32>
    %cst_26 = arith.constant 0.899999976 : f32
    %73 = vector.broadcast %cst_26 : f32 to vector<32x128xf32>
    %74 = arith.mulf %73, %63 : vector<32x128xf32>
    %75 = arith.subf %66, %74 : vector<32x128xf32>
    %cst_27 = arith.constant 2.500000e-02 : f32
    %76 = vector.broadcast %cst_27 : f32 to vector<32x128xf32>
    %77 = arith.mulf %76, %64 : vector<32x128xf32>
    %78 = arith.subf %75, %77 : vector<32x128xf32>
    %cst_28 = arith.constant 0.000000e+00 : f32
    %79 = vector.broadcast %cst_28 : f32 to vector<32x128xf32>
    %80 = arith.select %68, %78, %79 : vector<32x128xi1>, vector<32x128xf32>
    %cst_29 = arith.constant 1.000000e+00 : f32
    %cst_30 = arith.constant 0.000000e+00 : f32
    %81 = vector.broadcast %cst_29 : f32 to vector<32x128xf32>
    %82 = vector.broadcast %cst_30 : f32 to vector<32x128xf32>
    %83 = arith.select %68, %81, %82 : vector<32x128xi1>, vector<32x128xf32>
    %c0_31 = arith.constant 0 : index
    %c0_32 = arith.constant 0 : index
    %c0_33 = arith.constant 0 : index
    %84 = vector.load %arg6[%c0_31, %c0_32, %c0_33] : memref<3x8x128xf32, #tpu.memory_space<vmem>>, vector<1x8x128xf32>
    %85 = vector.shape_cast %84 : vector<1x8x128xf32> to vector<8x128xf32>
    %86 = vector.shape_cast %72 : vector<32x128xf32> to vector<4x8x128xf32>
    %cst_34 = arith.constant dense<0.000000e+00> : vector<8x128xf32>
    %87 = vector.multi_reduction <add>, %86, %cst_34 [0] : vector<4x8x128xf32> to vector<8x128xf32>
    %88 = arith.addf %85, %87 : vector<8x128xf32>
    %c0_35 = arith.constant 0 : index
    %c0_36 = arith.constant 0 : index
    %c0_37 = arith.constant 0 : index
    %89 = vector.load %arg6[%c0_35, %c0_36, %c0_37] : memref<3x8x128xf32, #tpu.memory_space<vmem>>, vector<1x8x128xf32>
    %90 = vector.shape_cast %89 : vector<1x8x128xf32> to vector<8x128xf32>
    %91 = vector.shape_cast %88 : vector<8x128xf32> to vector<1x8x128xf32>
    tpu.vector_store %arg6[%c0_35, %c0_36, %c0_37], %91 {strides = array<i32>} : memref<3x8x128xf32, #tpu.memory_space<vmem>>, vector<1x8x128xf32>,
    %c1_38 = arith.constant 1 : index
    %c0_39 = arith.constant 0 : index
    %c0_40 = arith.constant 0 : index
    %92 = vector.load %arg6[%c1_38, %c0_39, %c0_40] : memref<3x8x128xf32, #tpu.memory_space<vmem>>, vector<1x8x128xf32>
    %93 = vector.shape_cast %92 : vector<1x8x128xf32> to vector<8x128xf32>
    %94 = vector.shape_cast %83 : vector<32x128xf32> to vector<4x8x128xf32>
    %cst_41 = arith.constant dense<0.000000e+00> : vector<8x128xf32>
    %95 = vector.multi_reduction <add>, %94, %cst_41 [0] : vector<4x8x128xf32> to vector<8x128xf32>
    %96 = arith.addf %93, %95 : vector<8x128xf32>
    %c1_42 = arith.constant 1 : index
    %c0_43 = arith.constant 0 : index
    %c0_44 = arith.constant 0 : index
    %97 = vector.load %arg6[%c1_42, %c0_43, %c0_44] : memref<3x8x128xf32, #tpu.memory_space<vmem>>, vector<1x8x128xf32>
    %98 = vector.shape_cast %97 : vector<1x8x128xf32> to vector<8x128xf32>
    %99 = vector.shape_cast %96 : vector<8x128xf32> to vector<1x8x128xf32>
    tpu.vector_store %arg6[%c1_42, %c0_43, %c0_44], %99 {strides = array<i32>} : memref<3x8x128xf32, #tpu.memory_space<vmem>>, vector<1x8x128xf32>,
    %c2_45 = arith.constant 2 : index
    %c0_46 = arith.constant 0 : index
    %c0_47 = arith.constant 0 : index
    %100 = vector.load %arg6[%c2_45, %c0_46, %c0_47] : memref<3x8x128xf32, #tpu.memory_space<vmem>>, vector<1x8x128xf32>
    %101 = vector.shape_cast %100 : vector<1x8x128xf32> to vector<8x128xf32>
    %102 = vector.shape_cast %80 : vector<32x128xf32> to vector<4x8x128xf32>
    %cst_48 = arith.constant dense<0.000000e+00> : vector<8x128xf32>
    %103 = vector.multi_reduction <add>, %102, %cst_48 [0] : vector<4x8x128xf32> to vector<8x128xf32>
    %104 = arith.addf %101, %103 : vector<8x128xf32>
    %c2_49 = arith.constant 2 : index
    %c0_50 = arith.constant 0 : index
    %c0_51 = arith.constant 0 : index
    %105 = vector.load %arg6[%c2_49, %c0_50, %c0_51] : memref<3x8x128xf32, #tpu.memory_space<vmem>>, vector<1x8x128xf32>
    %106 = vector.shape_cast %105 : vector<1x8x128xf32> to vector<8x128xf32>
    %107 = vector.shape_cast %104 : vector<8x128xf32> to vector<1x8x128xf32>
    tpu.vector_store %arg6[%c2_49, %c0_50, %c0_51], %107 {strides = array<i32>} : memref<3x8x128xf32, #tpu.memory_space<vmem>>, vector<1x8x128xf32>,
    %c1_i32_52 = arith.constant 1 : i32
    %c0_i32_53 = arith.constant 0 : i32
    %108 = arith.cmpi eq, %arg2, %c0_i32_53 : i32
    %109 = arith.extui %108 : i1 to i32
    %c0_i32_54 = arith.constant 0 : i32
    %110 = arith.cmpi ne, %109, %c0_i32_54 : i32
    scf.if %110 {
      %c0_55 = arith.constant 0 : index
      %c0_56 = arith.constant 0 : index
      %c0_57 = arith.constant 0 : index
      %111 = vector.load %arg6[%c0_55, %c0_56, %c0_57] : memref<3x8x128xf32, #tpu.memory_space<vmem>>, vector<3x8x128xf32>
      %cst_58 = arith.constant dense<0.000000e+00> : vector<3x128xf32>
      %112 = vector.multi_reduction <add>, %111, %cst_58 [1] : vector<3x8x128xf32> to vector<3x128xf32>
      %c0_59 = arith.constant 0 : index
      %c0_60 = arith.constant 0 : index
      %c0_61 = arith.constant 0 : index
      %c0_62 = arith.constant 0 : index
      %113 = vector.load %arg5[%c0_59, %c0_60, %c0_61, %c0_62] : memref<1x1x3x128xf32, #tpu.memory_space<vmem>>, vector<1x1x3x128xf32>
      %114 = vector.shape_cast %113 : vector<1x1x3x128xf32> to vector<3x128xf32>
      %115 = vector.shape_cast %112 : vector<3x128xf32> to vector<1x1x3x128xf32>
      tpu.vector_store %arg5[%c0_59, %c0_60, %c0_61, %c0_62], %115 {strides = array<i32>} : memref<1x1x3x128xf32, #tpu.memory_space<vmem>>, vector<1x1x3x128xf32>,
    } else {
    }
    return
  }
  func.func @transform_0(%arg0: i32, %arg1: i32, %arg2: i32) -> (i32, i32, i32, i32) {
    %c1_i32 = arith.constant 1 : i32
    %0 = arith.muli %arg1, %c1_i32 : i32
    %1 = arith.addi %0, %arg2 : i32
    %c0_i32 = arith.constant 0 : i32
    %2 = arith.minsi %1, %c0_i32 : i32
    %c0_i32_0 = arith.constant 0 : i32
    %c0_i32_1 = arith.constant 0 : i32
    %c0_i32_2 = arith.constant 0 : i32
    return %arg0, %c0_i32_0, %2, %c0_i32_1 : i32, i32, i32, i32
  }
  func.func @transform_1(%arg0: i32, %arg1: i32, %arg2: i32) -> (i32, i32, i32) {
    %c1_i32 = arith.constant 1 : i32
    %0 = arith.muli %arg1, %c1_i32 : i32
    %1 = arith.addi %0, %arg2 : i32
    %c0_i32 = arith.constant 0 : i32
    %2 = arith.minsi %1, %c0_i32 : i32
    %c0_i32_0 = arith.constant 0 : i32
    %c0_i32_1 = arith.constant 0 : i32
    return %arg0, %2, %c0_i32_0 : i32, i32, i32
  }
  func.func @transform_2(%arg0: i32, %arg1: i32, %arg2: i32) -> (i32, i32, i32, i32) {
    %c0_i32 = arith.constant 0 : i32
    %c0_i32_0 = arith.constant 0 : i32
    %c0_i32_1 = arith.constant 0 : i32
    return %arg0, %arg1, %c0_i32, %c0_i32_0 : i32, i32, i32, i32
  }
}

</mosaic_0001>

<llo_original>
// kernel: smooth_ce_dice_loss.1
$region0: #{smooth_ce_dice_loss.1}
  #allocation0 [shape = 'u32[]', space=smem, size = 0x4, offset = 0x4, fixed_abs, tag = 'smem constant byte address 0x4 - core index']
  #allocation1 [shape = 'u32[72,128]{1,0:T(1,128)}', space=vmem, size = 0x9000, scoped, tag = 'internal scratch']
  #allocation2 [shape = 'f32[3,8,128]{2,1,0:T(8,128)}', space=vmem, size = 0x3000, scoped, tag = 'scratch operand']
  %s0 = inlined_call_operand.vmem [shape: f32[2,4,32,128], index: 0, kind: input, shape index: {}]
  %s1 = inlined_call_operand.vmem [shape: s32[2,32,128], index: 1, kind: input, shape index: {}]
  %s2 = inlined_call_operand.vmem [shape: f32[2,1,3,128], index: 2, kind: output, shape index: {}]
  %s3 = sld [smem:[#allocation0]]
  $region49: #{smooth_ce_dice_loss.1} parent=0
    _
  %s5 = ssub.s32 1, %s3
  %s6 = scalar_select 0, %s5, %s3
  loop: start=0, step=1, limit=4
  $region2: #{smooth_ce_dice_loss.1} parent=0 // loop_pre_header
    _
  $region3: #{smooth_ce_dice_loss.1} parent=0 // loop_header
    %s8 = sphi 0, %s12
    %p9 = scmp.ge.s32.totalorder %s8, 4
    %s15 = sphi 0, %s34
    %s16 = sphi 0, %s30
    %s17 = sphi 0, %s26
    %s18 = sphi 0, %s15
    %s19 = sphi 0, %s16
    %s20 = sphi 0, %s17
    %s21 = sphi 0, %s18
    %s22 = sphi 0, %s19
    %s23 = sphi 0, %s20
    %s45 = sphi 0, %s47
    %s48 = sphi 0, %s45
    %s49 = sphi 0, %s48
    %s65 = sphi 0, %s49
    %s79 = sphi 0, %s81
    %s82 = sphi 0, %s79
    %s83 = sphi 0, %s82
    %s99 = sphi 0, %s83
    %s107 = sphi 0, %s109
    %s110 = sphi 0, %s107
    %s111 = sphi 0, %s110
    %s127 = sphi 0, %s111
  $region4: #{smooth_ce_dice_loss.1} parent=0 // loop_header_branch
    %11 = sbr.rel (%p9) target = $region8
  $region5: #{smooth_ce_dice_loss.1} parent=0 // loop_body
    %s13 = ssub.s32 %s8, 1
    %s14 = ssub.s32 %s8, 2
    %s24 = sadd.s32 1, %s17
    %p25 = scmp.ge.s32.totalorder %s24, 1
    %s26 = scalar_select %p25, 0, %s24
    %s27 = sadd.s32 1, %s16
    %s28 = scalar_select %p25, %s27, %s16
    %p29 = scmp.ge.s32.totalorder %s28, 1
    %s30 = scalar_select %p29, 0, %s28
    %s31 = sadd.s32 1, %s15
    %s32 = scalar_select %p29, %s31, %s15
    %p33 = scmp.ge.s32.totalorder %s32, 2
    %s34 = scalar_select %p33, 0, %s32
    %s35 = sadd.s32 %s16, %s17
    %p36 = scmp.lt.s32.totalorder %s35, 0
    %s37 = scalar_select %p36, %s35, 0
    %s38 = sadd.s32 %s30, %s26
    %p39 = scmp.lt.s32.totalorder %s38, 0
    %s40 = scalar_select %p39, %s38, 0
    %s41 = ssub.s32 %s15, %s34
    %s42 = ssub.s32 %s37, %s40
    %s43 = sor.u32 %s41, %s42
    %p44 = scmp.eq.s32.totalorder %s43, 0
    %s46 = sadd.s32 %s45, 1
    %s47 = scalar_select %p44, %s45, %s46
    %p50 = pneg %p44
    %p51 = scmp.eq.s32.totalorder %s8, 1
    %p52 = por %p50, %p51
    %p53 = scmp.ne.s32.totalorder %s45, %s48
    %p54 = scmp.eq.s32.totalorder %s8, 0
    %p55 = por %p53, %p54
    %p56 = scmp.ne.s32.totalorder %s45, %s48
    %p57 = scmp.eq.s32.totalorder %s13, 1
    %p58 = por %p56, %p57
    %p59 = scmp.ne.s32.totalorder %s48, %s49
    %p60 = scmp.eq.s32.totalorder %s13, 0
    %p61 = por %p59, %p60
    %p62 = scmp.ne.s32.totalorder %s48, %s49
    %p63 = scmp.eq.s32.totalorder %s14, 1
    %p64 = por %p62, %p63
    %p66 = scmp.ne.s32.totalorder %s49, %s65
    %p67 = scmp.eq.s32.totalorder %s14, 0
    %p68 = por %p66, %p67
    %s69 = sadd.s32 %s16, %s17
    %p70 = scmp.lt.s32.totalorder %s69, 0
    %s71 = scalar_select %p70, %s69, 0
    %s72 = sadd.s32 %s30, %s26
    %p73 = scmp.lt.s32.totalorder %s72, 0
    %s74 = scalar_select %p73, %s72, 0
    %s75 = ssub.s32 %s15, %s34
    %s76 = ssub.s32 %s71, %s74
    %s77 = sor.u32 %s75, %s76
    %p78 = scmp.eq.s32.totalorder %s77, 0
    %s80 = sadd.s32 %s79, 1
    %s81 = scalar_select %p78, %s79, %s80
    %p84 = pneg %p78
    %p85 = scmp.eq.s32.totalorder %s8, 1
    %p86 = por %p84, %p85
    %p87 = scmp.ne.s32.totalorder %s79, %s82
    %p88 = scmp.eq.s32.totalorder %s8, 0
    %p89 = por %p87, %p88
    %p90 = scmp.ne.s32.totalorder %s79, %s82
    %p91 = scmp.eq.s32.totalorder %s13, 1
    %p92 = por %p90, %p91
    %p93 = scmp.ne.s32.totalorder %s82, %s83
    %p94 = scmp.eq.s32.totalorder %s13, 0
    %p95 = por %p93, %p94
    %p96 = scmp.ne.s32.totalorder %s82, %s83
    %p97 = scmp.eq.s32.totalorder %s14, 1
    %p98 = por %p96, %p97
    %p100 = scmp.ne.s32.totalorder %s83, %s99
    %p101 = scmp.eq.s32.totalorder %s14, 0
    %p102 = por %p100, %p101
    %s103 = ssub.s32 %s15, %s34
    %s104 = ssub.s32 %s16, %s30
    %s105 = sor.u32 %s103, %s104
    %p106 = scmp.eq.s32.totalorder %s105, 0
    %s108 = sadd.s32 %s107, 1
    %s109 = scalar_select %p106, %s107, %s108
    %p112 = pneg %p106
    %p113 = scmp.eq.s32.totalorder %s8, 1
    %p114 = por %p112, %p113
    %p115 = scmp.ne.s32.totalorder %s107, %s110
    %p116 = scmp.eq.s32.totalorder %s8, 0
    %p117 = por %p115, %p116
    %p118 = scmp.ne.s32.totalorder %s107, %s110
    %p119 = scmp.eq.s32.totalorder %s13, 1
    %p120 = por %p118, %p119
    %p121 = scmp.ne.s32.totalorder %s110, %s111
    %p122 = scmp.eq.s32.totalorder %s13, 0
    %p123 = por %p121, %p122
    %p124 = scmp.ne.s32.totalorder %s110, %s111
    %p125 = scmp.eq.s32.totalorder %s14, 1
    %p126 = por %p124, %p125
    %p128 = scmp.ne.s32.totalorder %s111, %s127
    %p129 = scmp.eq.s32.totalorder %s14, 0
    %p130 = por %p128, %p129
    %p131 = scmp.le.s32.totalorder 1, %s8
    %p132 = scmp.lt.s32.totalorder %s8, 3
    %p133 = pnand %p131, %p132
    %p134 = pneg %p133
    // Predicated region
    $region9: #{smooth_ce_dice_loss.1} parent=5 // pred_check
      _
    $region10: #{smooth_ce_dice_loss.1} parent=5 // pred_check_branch
      %136 = sbr.rel (%p133) target = $region12
    $region11: #{smooth_ce_dice_loss.1} parent=5 // pred_region
      %s137 = ssub.s32 %s8, 1
    $region12: #{smooth_ce_dice_loss.1} parent=5 // pred_fallthru
      _
    %p138 = scmp.lt.s32.totalorder %s8, 2
    // Predicated region
    $region13: #{smooth_ce_dice_loss.1} parent=5 // pred_check
      %p139 = pneg %p138
    $region14: #{smooth_ce_dice_loss.1} parent=5 // pred_check_branch
      %141 = sbr.rel (%p139) target = $region16
    $region15: #{smooth_ce_dice_loss.1} parent=5 // pred_region
      // Predicated region
      $region17: #{smooth_ce_dice_loss.1} parent=15 // pred_check
        %p142 = pneg %p55
      $region18: #{smooth_ce_dice_loss.1} parent=15 // pred_check_branch
        %144 = sbr.rel (%p142) target = $region20
      $region19: #{smooth_ce_dice_loss.1} parent=15 // pred_region
        %s145 = sadd.s32 %s16, %s17
        %p146 = scmp.lt.s32.totalorder %s145, 0
        %s147 = scalar_select %p146, %s145, 0
        %s148 = smul.u32 4, %s147
        %p149 = scmp.lt.s32.totalorder %s15, 1
        %s150 = scalar_select %p149, %s15, 1
        %p151 = scmp.lt.s32.totalorder %s148, 3
        %s152 = scalar_select %p151, %s148, 3
        %s153 = smul.addr %s150, 16
        %s154 = sadd.s32 %s152, %s153
        %s155 = smul.addr %s154, 8
        %s156 = scalar_lea.vmem %s0, %s155
        %s157 = sadd.s32 %s16, %s17
        %p158 = scmp.lt.s32.totalorder %s157, 0
        %s159 = scalar_select %p158, %s157, 0
        %s160 = smul.u32 4, %s159
      $region20: #{smooth_ce_dice_loss.1} parent=15 // pred_fallthru
        _
      // Predicated region
      $region21: #{smooth_ce_dice_loss.1} parent=15 // pred_check
        %p161 = pneg %p89
      $region22: #{smooth_ce_dice_loss.1} parent=15 // pred_check_branch
        %163 = sbr.rel (%p161) target = $region24
      $region23: #{smooth_ce_dice_loss.1} parent=15 // pred_region
        %s164 = sadd.s32 %s16, %s17
        %p165 = scmp.lt.s32.totalorder %s164, 0
        %s166 = scalar_select %p165, %s164, 0
        %s167 = smul.u32 4, %s166
        %p168 = scmp.lt.s32.totalorder %s15, 1
        %s169 = scalar_select %p168, %s15, 1
        %p170 = scmp.lt.s32.totalorder %s167, 3
        %s171 = scalar_select %p170, %s167, 3
        %s172 = smul.addr %s169, 4
        %s173 = sadd.s32 %s171, %s172
        %s174 = smul.addr %s173, 8
        %s175 = scalar_lea.vmem %s1, %s174
        %s176 = sadd.s32 %s16, %s17
        %p177 = scmp.lt.s32.totalorder %s176, 0
        %s178 = scalar_select %p177, %s176, 0
        %s179 = smul.u32 4, %s178
      $region24: #{smooth_ce_dice_loss.1} parent=15 // pred_fallthru
        _
    $region16: #{smooth_ce_dice_loss.1} parent=5 // pred_fallthru
      _
    %p180 = scmp.le.s32.totalorder 1, %s8
    %p181 = scmp.lt.s32.totalorder %s8, 3
    %p182 = pnand %p180, %p181
    %p183 = pneg %p182
    // Predicated region
    $region25: #{smooth_ce_dice_loss.1} parent=5 // pred_check
      _
    $region26: #{smooth_ce_dice_loss.1} parent=5 // pred_check_branch
      %185 = sbr.rel (%p182) target = $region28
    $region27: #{smooth_ce_dice_loss.1} parent=5 // pred_region
      %s186 = ssub.s32 %s8, 1
      %s187 = sadd.s32 %s19, %s20
      %p188 = scmp.lt.s32.totalorder %s187, 0
      %s189 = scalar_select %p188, %s187, 0
      %s190 = smul.u32 4, %s189
      %p191 = scmp.lt.s32.totalorder %s18, 1
      %s192 = scalar_select %p191, %s18, 1
      %p193 = scmp.lt.s32.totalorder %s190, 3
      %s194 = scalar_select %p193, %s190, 3
      %s195 = smul.addr %s192, 16
      %s196 = sadd.s32 %s194, %s195
      %s197 = smul.addr %s196, 8
      %s198 = scalar_lea.vmem %s0, %s197
      %p199 = pneg %p61
      %p200 = pneg %p58
      %s201 = sadd.s32 %s19, %s20
      %p202 = scmp.lt.s32.totalorder %s201, 0
      %s203 = scalar_select %p202, %s201, 0
      %s204 = smul.u32 4, %s203
      %p205 = scmp.lt.s32.totalorder %s18, 1
      %s206 = scalar_select %p205, %s18, 1
      %p207 = scmp.lt.s32.totalorder %s204, 3
      %s208 = scalar_select %p207, %s204, 3
      %s209 = smul.addr %s206, 4
      %s210 = sadd.s32 %s208, %s209
      %s211 = smul.addr %s210, 8
      %s212 = scalar_lea.vmem %s1, %s211
      %p213 = pneg %p95
      %p214 = pneg %p92
      %p215 = pneg %p123
      %p216 = pneg %p120
      %p217 = scmp.lt.s32.totalorder %s18, 1
      %s218 = scalar_select %p217, %s18, 1
      %p219 = scmp.lt.s32.totalorder %s19, 0
      %s220 = scalar_select %p219, %s19, 0
      %s221 = sadd.s32 %s220, %s218
      %s222 = smul.addr %s221, 4
      %s223 = scalar_lea.vmem %s2, %s222
      %s224 = sadd.s32 %s19, %s20
      %p225 = scmp.lt.s32.totalorder %s224, 0
      %s226 = scalar_select %p225, %s224, 0
      %s227 = smul.u32 4, %s226
      %p228 = scmp.lt.s32.totalorder %s18, 1
      %s229 = scalar_select %p228, %s18, 1
      %p230 = scmp.lt.s32.totalorder %s227, 3
      %s231 = scalar_select %p230, %s227, 3
      %s232 = smul.addr %s229, 16
      %s233 = sadd.s32 %s231, %s232
      %s234 = smul.addr %s233, 8
      %s235 = scalar_lea.vmem %s0, %s234
      %s236 = sadd.s32 %s19, %s20
      %p237 = scmp.lt.s32.totalorder %s236, 0
      %s238 = scalar_select %p237, %s236, 0
      %s239 = smul.u32 4, %s238
      %s240 = sadd.s32 %s19, %s20
      %p241 = scmp.lt.s32.totalorder %s240, 0
      %s242 = scalar_select %p241, %s240, 0
      %s243 = smul.u32 4, %s242
      %p244 = scmp.lt.s32.totalorder %s18, 1
      %s245 = scalar_select %p244, %s18, 1
      %p246 = scmp.lt.s32.totalorder %s243, 3
      %s247 = scalar_select %p246, %s243, 3
      %s248 = smul.addr %s245, 4
      %s249 = sadd.s32 %s247, %s248
      %s250 = smul.addr %s249, 8
      %s251 = scalar_lea.vmem %s1, %s250
      %s252 = sadd.s32 %s19, %s20
      %p253 = scmp.lt.s32.totalorder %s252, 0
      %s254 = scalar_select %p253, %s252, 0
      %s255 = smul.u32 4, %s254
      %p256 = scmp.lt.s32.totalorder %s18, 1
      %s257 = scalar_select %p256, %s18, 1
      %p258 = scmp.lt.s32.totalorder %s19, 0
      %s259 = scalar_select %p258, %s19, 0
      %s260 = sadd.s32 %s259, %s257
      %s261 = smul.addr %s260, 4
      %s262 = scalar_lea.vmem %s2, %s261
      %p263 = scmp.eq.s32.totalorder %s20, 0
      // Predicated region
      $region29: #{smooth_ce_dice_loss.1} parent=27 // pred_check
        %p264 = pneg %p263
      $region30: #{smooth_ce_dice_loss.1} parent=27 // pred_check_branch
        %266 = sbr.rel (%p264) target = $region32
      $region31: #{smooth_ce_dice_loss.1} parent=27 // pred_region
        %267 = vst [vmem:[#allocation2] sm:$0xff] 0.0
        %268 = vst [vmem:[#allocation2 + $0x8] sm:$0xff] 0.0
        %269 = vst [vmem:[#allocation2 + $0x10] sm:$0xff] 0.0
      $region32: #{smooth_ce_dice_loss.1} parent=27 // pred_fallthru
        _
      %v270 = vld [vmem:[%s251] sm:$0xff]
      %v271 = vld [vmem:[%s251 + $0x8] sm:$0xff]
      %v272 = vld [vmem:[%s251 + $0x10] sm:$0xff]
      %v273 = vld [vmem:[%s251 + $0x18] sm:$0xff]
      %v274 = vld [vmem:[%s235] sm:$0xff]
      %v275 = vld [vmem:[%s235 + $0x8] sm:$0xff]
      %v276 = vld [vmem:[%s235 + $0x10] sm:$0xff]
      %v277 = vld [vmem:[%s235 + $0x18] sm:$0xff]
      %s278 = sadd.s32 0, 32
      %s279 = scalar_lea.vmem %s235, %s278
      %v280 = vld [vmem:[%s279] sm:$0xff]
      %v281 = vld [vmem:[%s279 + $0x8] sm:$0xff]
      %v282 = vld [vmem:[%s279 + $0x10] sm:$0xff]
      %v283 = vld [vmem:[%s279 + $0x18] sm:$0xff]
      %v284 = vmax.f32 %v274, %v280
      %v285 = vmax.f32 %v275, %v281
      %v286 = vmax.f32 %v276, %v282
      %v287 = vmax.f32 %v277, %v283
      %s288 = sadd.s32 0, 64
      %s289 = scalar_lea.vmem %s235, %s288
      %v290 = vld [vmem:[%s289] sm:$0xff]
      %v291 = vld [vmem:[%s289 + $0x8] sm:$0xff]
      %v292 = vld [vmem:[%s289 + $0x10] sm:$0xff]
      %v293 = vld [vmem:[%s289 + $0x18] sm:$0xff]
      %v294 = vmax.f32 %v284, %v290
      %v295 = vmax.f32 %v285, %v291
      %v296 = vmax.f32 %v286, %v292
      %v297 = vmax.f32 %v287, %v293
      %s298 = sadd.s32 0, 96
      %s299 = scalar_lea.vmem %s235, %s298
      %v300 = vld [vmem:[%s299] sm:$0xff]
      %v301 = vld [vmem:[%s299 + $0x8] sm:$0xff]
      %v302 = vld [vmem:[%s299 + $0x10] sm:$0xff]
      %v303 = vld [vmem:[%s299 + $0x18] sm:$0xff]
      %v304 = vmax.f32 %v294, %v300
      %v305 = vmax.f32 %v295, %v301
      %v306 = vmax.f32 %v296, %v302
      %v307 = vmax.f32 %v297, %v303
      %v308 = vsub.f32 %v274, %v304
      %v309 = vsub.f32 %v275, %v305
      %v310 = vsub.f32 %v276, %v306
      %v311 = vsub.f32 %v277, %v307
      %v312 = vmul.f32 %v308, 1.442695
      %v313 = vpow.pop %v312
      %v314 = vmul.f32 %v309, 1.442695
      %v315 = vpow.pop %v314
      %v316 = vmul.f32 %v310, 1.442695
      %v317 = vpow.pop %v316
      %v318 = vmul.f32 %v311, 1.442695
      %v319 = vpow.pop %v318
      %vm320 = vcmp.eq.s32.totalorder %v270, 0
      %vm321 = vcmp.eq.s32.totalorder %v271, 0
      %vm322 = vcmp.eq.s32.totalorder %v272, 0
      %vm323 = vcmp.eq.s32.totalorder %v273, 0
      %v324 = vsel %vm320, %v274, 0.0
      %v325 = vsel %vm321, %v275, 0.0
      %v326 = vsel %vm322, %v276, 0.0
      %v327 = vsel %vm323, %v277, 0.0
      %v328 = vsub.f32 %v280, %v304
      %v329 = vsub.f32 %v281, %v305
      %v330 = vsub.f32 %v282, %v306
      %v331 = vsub.f32 %v283, %v307
      %v332 = vmul.f32 %v328, 1.442695
      %v333 = vpow.pop %v332
      %v334 = vmul.f32 %v329, 1.442695
      %v335 = vpow.pop %v334
      %v336 = vmul.f32 %v330, 1.442695
      %v337 = vpow.pop %v336
      %v338 = vmul.f32 %v331, 1.442695
      %v339 = vpow.pop %v338
      %v340 = vadd.f32 %v313, %v333
      %v341 = vadd.f32 %v315, %v335
      %v342 = vadd.f32 %v317, %v337
      %v343 = vadd.f32 %v319, %v339
      %vm344 = vcmp.eq.s32.totalorder %v270, 1
      %vm345 = vcmp.eq.s32.totalorder %v271, 1
      %vm346 = vcmp.eq.s32.totalorder %v272, 1
      %vm347 = vcmp.eq.s32.totalorder %v273, 1
      %v348 = vsel %vm344, %v280, 0.0
      %v349 = vsel %vm345, %v281, 0.0
      %v350 = vsel %vm346, %v282, 0.0
      %v351 = vsel %vm347, %v283, 0.0
      %v352 = vadd.f32 %v324, %v348
      %v353 = vadd.f32 %v325, %v349
      %v354 = vadd.f32 %v326, %v350
      %v355 = vadd.f32 %v327, %v351
      %v356 = vadd.f32 %v274, %v280
      %v357 = vadd.f32 %v275, %v281
      %v358 = vadd.f32 %v276, %v282
      %v359 = vadd.f32 %v277, %v283
      %v360 = vsub.f32 %v290, %v304
      %v361 = vsub.f32 %v291, %v305
      %v362 = vsub.f32 %v292, %v306
      %v363 = vsub.f32 %v293, %v307
      %v364 = vmul.f32 %v360, 1.442695
      %v365 = vpow.pop %v364
      %v366 = vmul.f32 %v361, 1.442695
      %v367 = vpow.pop %v366
      %v368 = vmul.f32 %v362, 1.442695
      %v369 = vpow.pop %v368
      %v370 = vmul.f32 %v363, 1.442695
      %v371 = vpow.pop %v370
      %v372 = vadd.f32 %v340, %v365
      %v373 = vadd.f32 %v341, %v367
      %v374 = vadd.f32 %v342, %v369
      %v375 = vadd.f32 %v343, %v371
      %vm376 = vcmp.eq.s32.totalorder %v270, 2
      %vm377 = vcmp.eq.s32.totalorder %v271, 2
      %vm378 = vcmp.eq.s32.totalorder %v272, 2
      %vm379 = vcmp.eq.s32.totalorder %v273, 2
      %v380 = vsel %vm376, %v290, 0.0
      %v381 = vsel %vm377, %v291, 0.0
      %v382 = vsel %vm378, %v292, 0.0
      %v383 = vsel %vm379, %v293, 0.0
      %v384 = vadd.f32 %v352, %v380
      %v385 = vadd.f32 %v353, %v381
      %v386 = vadd.f32 %v354, %v382
      %v387 = vadd.f32 %v355, %v383
      %v388 = vadd.f32 %v356, %v290
      %v389 = vadd.f32 %v357, %v291
      %v390 = vadd.f32 %v358, %v292
      %v391 = vadd.f32 %v359, %v293
      %v392 = vsub.f32 %v300, %v304
      %v393 = vsub.f32 %v301, %v305
      %v394 = vsub.f32 %v302, %v306
      %v395 = vsub.f32 %v303, %v307
      %v396 = vmul.f32 %v392, 1.442695
      %v397 = vpow.pop %v396
      %v398 = vmul.f32 %v393, 1.442695
      %v399 = vpow.pop %v398
      %v400 = vmul.f32 %v394, 1.442695
      %v401 = vpow.pop %v400
      %v402 = vmul.f32 %v395, 1.442695
      %v403 = vpow.pop %v402
      %v404 = vadd.f32 %v372, %v397
      %v405 = vadd.f32 %v373, %v399
      %v406 = vadd.f32 %v374, %v401
      %v407 = vadd.f32 %v375, %v403
      %vm408 = vcmp.eq.s32.totalorder %v270, 3
      %vm409 = vcmp.eq.s32.totalorder %v271, 3
      %vm410 = vcmp.eq.s32.totalorder %v272, 3
      %vm411 = vcmp.eq.s32.totalorder %v273, 3
      %v412 = vsel %vm408, %v300, 0.0
      %v413 = vsel %vm409, %v301, 0.0
      %v414 = vsel %vm410, %v302, 0.0
      %v415 = vsel %vm411, %v303, 0.0
      %v416 = vadd.f32 %v384, %v412
      %v417 = vadd.f32 %v385, %v413
      %v418 = vadd.f32 %v386, %v414
      %v419 = vadd.f32 %v387, %v415
      %v420 = vadd.f32 %v388, %v300
      %v421 = vadd.f32 %v389, %v301
      %v422 = vadd.f32 %v390, %v302
      %v423 = vadd.f32 %v391, %v303
      %v424 = vlog2.pop %v404
      %v425 = vmul.f32 %v424, 0.6931472
      %v426 = vlog2.pop %v405
      %v427 = vmul.f32 %v426, 0.6931472
      %v428 = vlog2.pop %v406
      %v429 = vmul.f32 %v428, 0.6931472
      %v430 = vlog2.pop %v407
      %v431 = vmul.f32 %v430, 0.6931472
      %v432 = vadd.f32 %v304, %v425
      %v433 = vadd.f32 %v305, %v427
      %v434 = vadd.f32 %v306, %v429
      %v435 = vadd.f32 %v307, %v431
      %vm436 = vcmp.ne.s32.totalorder %v270, 255
      %vm437 = vcmp.ne.s32.totalorder %v271, 255
      %vm438 = vcmp.ne.s32.totalorder %v272, 255
      %vm439 = vcmp.ne.s32.totalorder %v273, 255
      %v440 = vsub.f32 %v416, %v432
      %v441 = vsub.f32 %v417, %v433
      %v442 = vsub.f32 %v418, %v434
      %v443 = vsub.f32 %v419, %v435
      %v444 = vmul.f32 %v440, 1.442695
      %v445 = vpow.pop %v444
      %v446 = vmul.f32 %v441, 1.442695
      %v447 = vpow.pop %v446
      %v448 = vmul.f32 %v442, 1.442695
      %v449 = vpow.pop %v448
      %v450 = vmul.f32 %v443, 1.442695
      %v451 = vpow.pop %v450
      %v452 = vsel %vm436, %v445, 0.0
      %v453 = vsel %vm437, %v447, 0.0
      %v454 = vsel %vm438, %v449, 0.0
      %v455 = vsel %vm439, %v451, 0.0
      %v456 = vmul.f32 %v416, 0.9
      %v457 = vmul.f32 %v417, 0.9
      %v458 = vmul.f32 %v418, 0.9
      %v459 = vmul.f32 %v419, 0.9
      %v460 = vsub.f32 %v432, %v456
      %v461 = vsub.f32 %v433, %v457
      %v462 = vsub.f32 %v434, %v458
      %v463 = vsub.f32 %v435, %v459
      %v464 = vmul.f32 %v420, 0.025
      %v465 = vmul.f32 %v421, 0.025
      %v466 = vmul.f32 %v422, 0.025
      %v467 = vmul.f32 %v423, 0.025
      %v468 = vsub.f32 %v460, %v464
      %v469 = vsub.f32 %v461, %v465
      %v470 = vsub.f32 %v462, %v466
      %v471 = vsub.f32 %v463, %v467
      %v472 = vsel %vm436, %v468, 0.0
      %v473 = vsel %vm437, %v469, 0.0
      %v474 = vsel %vm438, %v470, 0.0
      %v475 = vsel %vm439, %v471, 0.0
      %v476 = vsel %vm436, 1.0, 0.0
      %v477 = vsel %vm437, 1.0, 0.0
      %v478 = vsel %vm438, 1.0, 0.0
      %v479 = vsel %vm439, 1.0, 0.0
      %v480 = vld [vmem:[#allocation2] sm:$0xff]
      %v481 = vadd.f32 %v452, %v453
      %v482 = vadd.f32 %v481, %v454
      %v483 = vadd.f32 %v482, %v455
      %v484 = vadd.f32 %v480, %v483
      %485 = vst [vmem:[#allocation2] sm:$0xff] %v484
      %s486 = scalar_lea.vmem [#allocation2], 8
      %v487 = vld [vmem:[%s486] sm:$0xff]
      %v488 = vadd.f32 %v476, %v477
      %v489 = vadd.f32 %v488, %v478
      %v490 = vadd.f32 %v489, %v479
      %v491 = vadd.f32 %v487, %v490
      %492 = vst [vmem:[%s486] sm:$0xff] %v491
      %s493 = scalar_lea.vmem [#allocation2], 16
      %v494 = vld [vmem:[%s493] sm:$0xff]
      %v495 = vadd.f32 %v472, %v473
      %v496 = vadd.f32 %v495, %v474
      %v497 = vadd.f32 %v496, %v475
      %v498 = vadd.f32 %v494, %v497
      %499 = vst [vmem:[%s493] sm:$0xff] %v498
      // Predicated region
      $region33: #{smooth_ce_dice_loss.1} parent=27 // pred_check
        %p500 = pneg %p263
      $region34: #{smooth_ce_dice_loss.1} parent=27 // pred_check_branch
        %502 = sbr.rel (%p500) target = $region36
      $region35: #{smooth_ce_dice_loss.1} parent=27 // pred_region
        %v503 = vld [vmem:[#allocation2] sm:$0xff]
        %v504 = vld [vmem:[#allocation2 + $0x8] sm:$0xff]
        %v505 = vld [vmem:[#allocation2 + $0x10] sm:$0xff]
        %v506 = vrot.slane %v503, 4
        %v507 = vadd.f32 %v503, %v506
        %v508 = vrot.slane %v507, 2
        %v509 = vadd.f32 %v507, %v508
        %v510 = vrot.slane %v509, 1
        %v511 = vadd.f32 %v509, %v510
        %v512 = vrot.slane %v504, 4
        %v513 = vadd.f32 %v504, %v512
        %v514 = vrot.slane %v513, 2
        %v515 = vadd.f32 %v513, %v514
        %v516 = vrot.slane %v515, 1
        %v517 = vadd.f32 %v515, %v516
        %v518 = vrot.slane %v505, 4
        %v519 = vadd.f32 %v505, %v518
        %v520 = vrot.slane %v519, 2
        %v521 = vadd.f32 %v519, %v520
        %v522 = vrot.slane %v521, 1
        %v523 = vadd.f32 %v521, %v522
        %vm527 = vcmask 1041409
        %v528 = vsel %vm527, %v517, %v511
        %vm529 = vcmask 1042434
        %v530 = vsel %vm529, %v523, %v528
        %532 = vst [vmem:[%s262] sm:$0x7] %v530
      $region36: #{smooth_ce_dice_loss.1} parent=27 // pred_fallthru
        _
      %p533 = scmp.lt.s32.totalorder %s18, 1
      %s534 = scalar_select %p533, %s18, 1
      %p535 = scmp.lt.s32.totalorder %s19, 0
      %s536 = scalar_select %p535, %s19, 0
      %s537 = sadd.s32 %s536, %s534
      %s538 = smul.addr %s537, 4
      %s539 = scalar_lea.vmem %s2, %s538
      // Predicated region
      $region37: #{smooth_ce_dice_loss.1} parent=27 // pred_check
        %p540 = pneg %p120
      $region38: #{smooth_ce_dice_loss.1} parent=27 // pred_check_branch
        %542 = sbr.rel (%p540) target = $region40
      $region39: #{smooth_ce_dice_loss.1} parent=27 // pred_region
        _
      $region40: #{smooth_ce_dice_loss.1} parent=27 // pred_fallthru
        _
    $region28: #{smooth_ce_dice_loss.1} parent=5 // pred_fallthru
      _
    %p543 = scmp.le.s32.totalorder 2, %s8
    // Predicated region
    $region41: #{smooth_ce_dice_loss.1} parent=5 // pred_check
      %p544 = pneg %p543
    $region42: #{smooth_ce_dice_loss.1} parent=5 // pred_check_branch
      %546 = sbr.rel (%p544) target = $region44
    $region43: #{smooth_ce_dice_loss.1} parent=5 // pred_region
      %s547 = ssub.s32 %s8, 2
      // Predicated region
      $region45: #{smooth_ce_dice_loss.1} parent=43 // pred_check
        %p548 = pneg %p126
      $region46: #{smooth_ce_dice_loss.1} parent=43 // pred_check_branch
        %550 = sbr.rel (%p548) target = $region48
      $region47: #{smooth_ce_dice_loss.1} parent=43 // pred_region
        %p551 = scmp.lt.s32.totalorder %s21, 1
        %s552 = scalar_select %p551, %s21, 1
        %p553 = scmp.lt.s32.totalorder %s22, 0
        %s554 = scalar_select %p553, %s22, 0
        %s555 = sadd.s32 %s554, %s552
        %s556 = smul.addr %s555, 4
        %s557 = scalar_lea.vmem %s2, %s556
      $region48: #{smooth_ce_dice_loss.1} parent=43 // pred_fallthru
        _
    $region44: #{smooth_ce_dice_loss.1} parent=5 // pred_fallthru
      _
  $region6: #{smooth_ce_dice_loss.1} parent=0 // loop_footer
    %s12 = sadd.s32 1, %s8
  $region7: #{smooth_ce_dice_loss.1} parent=0 // loop_footer_branch
    %7 = sbr.rel target = $region3
  $region8: #{smooth_ce_dice_loss.1} parent=0 // loop_exit
    _

</llo_original>
